<compile_context>
chip_gen: v5e
topology: v5e:2x2
jax: 0.10.0
libtpu: 0.0.40
codegen_flags: <defaults>
</compile_context>

<pallas_src>
import functools

import jax
import jax.numpy as jnp
from jax import lax
from jax.experimental import pallas as pl
from jax.experimental.pallas import tpu as pltpu


def _mlp_kernel(x_ref, w1_ref, w2_ref, o_ref, acc_ref, *, compute_dtype):
    """One (batch-tile, hidden-tile) grid step of y = relu(x @ W1.T) @ W2.T."""
    k = pl.program_id(1)

    @pl.when(k == 0)
    def _():
        acc_ref[...] = jnp.zeros_like(acc_ref)

    x = x_ref[...]      # [tm, in_f]
    w1 = w1_ref[...]    # [th, in_f]  (PyTorch Linear layout)
    if compute_dtype is not None:
        x = x.astype(compute_dtype)
        w1 = w1.astype(compute_dtype)

    # h_k = x @ W1_k.T : contract the in_features axis of both operands.
    h = lax.dot_general(x, w1, (((1,), (1,)), ((), ())),
                        preferred_element_type=jnp.float32)   # [tm, th] f32
    h = jnp.maximum(h, 0.0)  # ReLU kept in f32 on the VPU (v5e has no bf16 VPU)

    w2 = w2_ref[...]    # [out_pad, th]  (PyTorch Linear layout, lane-padded)
    h_op = h.astype(compute_dtype) if compute_dtype is not None else h.astype(w2.dtype)
    # acc += h_k @ W2_k.T : contract this hidden chunk.
    acc_ref[...] += lax.dot_general(h_op, w2, (((1,), (1,)), ((), ())),
                                    preferred_element_type=jnp.float32)

    @pl.when(k == pl.num_programs(1) - 1)
    def _():
        o_ref[...] = acc_ref[...].astype(o_ref.dtype)


def mlp_forward(x, w1, w2, *, tm=None, th=None, compute_dtype=None):
    """Fused MLP forward.

    Args:
      x : [B, in_features]
      w1: [4*in_features, in_features]   (PyTorch Linear weight layout)
      w2: [out_features, 4*in_features]  (PyTorch Linear weight layout)
      compute_dtype: optional dtype for MXU operands (e.g. jnp.bfloat16 on
        v6e/v7x); accumulation stays in f32.
    Returns:
      [B, out_features]
    """
    B, in_f = x.shape
    hidden, in_f2 = w1.shape
    out_f, hidden2 = w2.shape
    assert in_f == in_f2 and hidden == hidden2

    # Lane-dense output: pad out_features (and W2's rows) to a multiple of 128
    # so the kernel emits unmasked vector stores. Zero padding keeps the math
    # identical; ideally the padded W2 is prepared once outside the jit.
    out_pad = out_f if out_f % 128 == 0 else int(pl.cdiv(out_f, 128)) * 128
    w2_p = w2 if out_pad == out_f else jnp.pad(w2, ((0, out_pad - out_f), (0, 0)))

    # Batch tile: <=256 rows keeps the h intermediate / pipeline depth sane.
    if tm is None:
        tm = B
        for cand in (256, 128, 64, 32, 16, 8):
            if B % cand == 0:
                tm = cand
                break
    assert B % tm == 0, "ragged batch unsupported"  # TODO(synk): mask tail tile

    # Hidden tile: stream the hidden dim so weights are never fully resident.
    if th is None:
        th = hidden
        for cand in (512, 256, 128):
            if hidden % cand == 0:
                th = cand
                break
    assert hidden % th == 0

    grid = (B // tm, hidden // th)

    isz = lambda a: a.dtype.itemsize
    # Double-buffered streamed tiles + f32 accumulator + h headroom.
    vmem_bytes = (
        2 * (tm * in_f * isz(x)
             + th * in_f * isz(w1)
             + out_pad * th * isz(w2_p)
             + tm * out_pad * isz(x))
        + tm * out_pad * 4
        + 2 * tm * th * 4
    )
    vmem_limit = int(min(max(2 * vmem_bytes, 32 * 1024 * 1024), 64 * 1024 * 1024))

    cost = pl.CostEstimate(
        flops=2 * B * in_f * hidden + 2 * B * hidden * out_pad,
        transcendentals=0,
        bytes_accessed=(x.size * isz(x) + w1.size * isz(w1)
                        + w2_p.size * isz(w2_p) + B * out_pad * isz(x)),
    )

    kernel = functools.partial(_mlp_kernel, compute_dtype=compute_dtype)

    y_pad = pl.pallas_call(
        kernel,
        out_shape=jax.ShapeDtypeStruct((B, out_pad), x.dtype),
        grid_spec=pltpu.PrefetchScalarGridSpec(
            num_scalar_prefetch=0,
            grid=grid,
            in_specs=[
                pl.BlockSpec((tm, in_f), lambda i, k: (i, 0)),      # x tile
                pl.BlockSpec((th, in_f), lambda i, k: (k, 0)),      # W1 chunk
                pl.BlockSpec((out_pad, th), lambda i, k: (0, k)),   # W2 chunk
            ],
            out_specs=pl.BlockSpec((tm, out_pad), lambda i, k: (i, 0)),
            scratch_shapes=[pltpu.VMEM((tm, out_pad), jnp.float32)],
        ),
        compiler_params=pltpu.CompilerParams(
            dimension_semantics=("parallel", "arbitrary"),
            vmem_limit_bytes=vmem_limit,
        ),
        cost_estimate=cost,
    )(x, w1, w2_p)

    return y_pad if out_pad == out_f else y_pad[:, :out_f]


if __name__ == "__main__":
    # Shapes consistent with the module: batch=8, in_features=32,
    # hidden = 4*32 = 128, out_features=64.
    B, in_features, out_features = 8, 32, 64
    hidden = 4 * in_features

    key = jax.random.PRNGKey(0)
    kx, k1, k2 = jax.random.split(key, 3)

    x = jax.random.normal(kx, (B, in_features), dtype=jnp.float32)
    w1 = jax.random.normal(k1, (hidden, in_features), dtype=jnp.float32) * 0.05
    w2 = jax.random.normal(k2, (out_features, hidden), dtype=jnp.float32) * 0.05

    with jax.default_matmul_precision("highest"):
        y_ref = jnp.maximum(x @ w1.T, 0.0) @ w2.T

    # f32 path (matches torch semantics, tight tolerance).
    y = mlp_forward(x, w1, w2)
    jax.block_until_ready(y)
    assert y.shape == (B, out_features)
    assert jnp.allclose(y, y_ref, atol=1e-4, rtol=1e-4)

    # bf16 MXU-operand path (v6e/v7x perf mode), f32 accumulation.
    y_bf16 = mlp_forward(x, w1, w2, compute_dtype=jnp.bfloat16)
    jax.block_until_ready(y_bf16)
    assert jnp.allclose(y_bf16, y_ref, atol=5e-2, rtol=5e-2)

    # Slightly larger case exercising the hidden-dim streaming accumulator
    # (4 k-steps) with a naturally lane-dense (no-pad) output.
    B2, in2, out2 = 64, 128, 256
    hid2 = 4 * in2
    kx2, k3, k4 = jax.random.split(jax.random.PRNGKey(1), 3)
    x2 = jax.random.normal(kx2, (B2, in2), dtype=jnp.float32)
    w1b = jax.random.normal(k3, (hid2, in2), dtype=jnp.float32) * 0.02
    w2b = jax.random.normal(k4, (out2, hid2), dtype=jnp.float32) * 0.02
    with jax.default_matmul_precision("highest"):
        y2_ref = jnp.maximum(x2 @ w1b.T, 0.0) @ w2b.T
    y2 = mlp_forward(x2, w1b, w2b, th=128)
    jax.block_until_ready(y2)
    assert jnp.allclose(y2, y2_ref, atol=1e-3, rtol=1e-3)

    print("KERNEL_OK")
</pallas_src>

<mosaic_0001>
module attributes {stable_mosaic.version = 11 : i64} {
  func.func @_mlp_kernel(%arg0: i32, %arg1: i32, %arg2: memref<8x32xf32, #tpu.memory_space<vmem>>, %arg3: memref<128x32xf32, #tpu.memory_space<vmem>>, %arg4: memref<128x128xf32, #tpu.memory_space<vmem>>, %arg5: memref<8x128xf32, #tpu.memory_space<vmem>>, %arg6: memref<8x128xf32, #tpu.memory_space<vmem>>) attributes {dimension_semantics = [#tpu.dimension_semantics<parallel>, #tpu.dimension_semantics<arbitrary>], iteration_bounds = array<i64: 1, 1>, scalar_prefetch = 0 : i64, scratch_operands = 1 : i64, tpu.core_type = #tpu.core_type<tc>, window_params = [{transform_indices = @transform_0, window_bounds = array<i64: 8, 32>}, {transform_indices = @transform_1, window_bounds = array<i64: 128, 32>}, {transform_indices = @transform_2, window_bounds = array<i64: 128, 128>}, {transform_indices = @transform_3, window_bounds = array<i64: 8, 128>}]} {
    %c0_i32 = arith.constant 0 : i32
    %0 = arith.cmpi eq, %arg1, %c0_i32 : i32
    %1 = arith.extui %0 : i1 to i32
    %c0_i32_0 = arith.constant 0 : i32
    %2 = arith.cmpi ne, %1, %c0_i32_0 : i32
    scf.if %2 {
      %cst_14 = arith.constant 0.000000e+00 : f32
      %16 = vector.broadcast %cst_14 : f32 to vector<8x128xf32>
      %c0_15 = arith.constant 0 : index
      %c0_16 = arith.constant 0 : index
      %17 = vector.load %arg6[%c0_15, %c0_16] : memref<8x128xf32, #tpu.memory_space<vmem>>, vector<8x128xf32>
      tpu.vector_store %arg6[%c0_15, %c0_16], %16 {strides = array<i32>} : memref<8x128xf32, #tpu.memory_space<vmem>>, vector<8x128xf32>,
    } else {
    }
    %c0 = arith.constant 0 : index
    %c0_1 = arith.constant 0 : index
    %3 = vector.load %arg2[%c0, %c0_1] : memref<8x32xf32, #tpu.memory_space<vmem>>, vector<8x32xf32>
    %c0_2 = arith.constant 0 : index
    %c0_3 = arith.constant 0 : index
    %4 = vector.load %arg3[%c0_2, %c0_3] : memref<128x32xf32, #tpu.memory_space<vmem>>, vector<128x32xf32>
    %cst = arith.constant dense<0.000000e+00> : vector<8x128xf32>
    %5 = tpu.matmul %3, %4, %cst {dimension_numbers = #tpu.dot_dimension_numbers<[1], [1], [0], [0], [0, 0, 1, 0], [], []>} : vector<8x32xf32>, vector<128x32xf32>, vector<8x128xf32> -> vector<8x128xf32>
    %cst_4 = arith.constant 0.000000e+00 : f32
    %6 = vector.broadcast %cst_4 : f32 to vector<8x128xf32>
    %7 = arith.maximumf %5, %6 : vector<8x128xf32>
    %c0_5 = arith.constant 0 : index
    %c0_6 = arith.constant 0 : index
    %8 = vector.load %arg4[%c0_5, %c0_6] : memref<128x128xf32, #tpu.memory_space<vmem>>, vector<128x128xf32>
    %c0_7 = arith.constant 0 : index
    %c0_8 = arith.constant 0 : index
    %9 = vector.load %arg6[%c0_7, %c0_8] : memref<8x128xf32, #tpu.memory_space<vmem>>, vector<8x128xf32>
    %cst_9 = arith.constant dense<0.000000e+00> : vector<8x128xf32>
    %10 = tpu.matmul %7, %8, %cst_9 {dimension_numbers = #tpu.dot_dimension_numbers<[1], [1], [0], [0], [0, 0, 1, 0], [], []>} : vector<8x128xf32>, vector<128x128xf32>, vector<8x128xf32> -> vector<8x128xf32>
    %11 = arith.addf %9, %10 : vector<8x128xf32>
    %c0_10 = arith.constant 0 : index
    %c0_11 = arith.constant 0 : index
    %12 = vector.load %arg6[%c0_10, %c0_11] : memref<8x128xf32, #tpu.memory_space<vmem>>, vector<8x128xf32>
    tpu.vector_store %arg6[%c0_10, %c0_11], %11 {strides = array<i32>} : memref<8x128xf32, #tpu.memory_space<vmem>>, vector<8x128xf32>,
    %c0_i32_12 = arith.constant 0 : i32
    %13 = arith.cmpi eq, %arg1, %c0_i32_12 : i32
    %14 = arith.extui %13 : i1 to i32
    %c0_i32_13 = arith.constant 0 : i32
    %15 = arith.cmpi ne, %14, %c0_i32_13 : i32
    scf.if %15 {
      %c0_14 = arith.constant 0 : index
      %c0_15 = arith.constant 0 : index
      %16 = vector.load %arg6[%c0_14, %c0_15] : memref<8x128xf32, #tpu.memory_space<vmem>>, vector<8x128xf32>
      %c0_16 = arith.constant 0 : index
      %c0_17 = arith.constant 0 : index
      %17 = vector.load %arg5[%c0_16, %c0_17] : memref<8x128xf32, #tpu.memory_space<vmem>>, vector<8x128xf32>
      tpu.vector_store %arg5[%c0_16, %c0_17], %16 {strides = array<i32>} : memref<8x128xf32, #tpu.memory_space<vmem>>, vector<8x128xf32>,
    } else {
    }
    return
  }
  func.func @transform_0(%arg0: i32, %arg1: i32) -> (i32, i32) {
    %c0_i32 = arith.constant 0 : i32
    %c0_i32_0 = arith.constant 0 : i32
    return %arg0, %c0_i32 : i32, i32
  }
  func.func @transform_1(%arg0: i32, %arg1: i32) -> (i32, i32) {
    %c0_i32 = arith.constant 0 : i32
    %c0_i32_0 = arith.constant 0 : i32
    return %arg1, %c0_i32 : i32, i32
  }
  func.func @transform_2(%arg0: i32, %arg1: i32) -> (i32, i32) {
    %c0_i32 = arith.constant 0 : i32
    %c0_i32_0 = arith.constant 0 : i32
    return %c0_i32, %arg1 : i32, i32
  }
  func.func @transform_3(%arg0: i32, %arg1: i32) -> (i32, i32) {
    %c0_i32 = arith.constant 0 : i32
    %c0_i32_0 = arith.constant 0 : i32
    return %arg0, %c0_i32 : i32, i32
  }
}

</mosaic_0001>

<llo_original>
// kernel: tpu_custom_call.1
$region0: #{tpu_custom_call.1}
  #allocation0 [shape = 'u32[]', space=smem, size = 0x4, offset = 0x4, fixed_abs, tag = 'smem constant byte address 0x4 - core index']
  #allocation1 [shape = 'u32[72,128]{1,0:T(1,128)}', space=vmem, size = 0x9000, scoped, tag = 'internal scratch']
  #allocation2 [shape = 'f32[8,128]{1,0:T(8,128)}', space=vmem, size = 0x1000, scoped, tag = 'scratch operand']
  %s0 = inlined_call_operand.vmem [shape: f32[8,32], index: 0, kind: input, shape index: {}]
  %s1 = inlined_call_operand.vmem [shape: f32[128,32], index: 1, kind: input, shape index: {}]
  %s2 = inlined_call_operand.vmem [shape: f32[128,128], index: 2, kind: input, shape index: {}]
  %s3 = inlined_call_operand.hbm [shape: f32[8,128], index: 3, kind: output, shape index: {}]
  %s4 = sld [smem:[#allocation0]]
  $region30: #{tpu_custom_call.1} parent=0
    _
  %s6 = ssub.s32 1, %s4
  %s7 = scalar_select 0, %s6, %s4
  $region1: #{tpu_custom_call.1} parent=0
    #allocation3 [shape = 'u8[4096]{0}', space=vmem, size = 0x1000, scoped, tag = 'output window, operand 0, single buffered']
    #allocation4 [shape = 's32[1]{0}', space=sflag, size = 0x4, scoped, tag = 'scoped memory for tpu_custom_call.1']
    %8 = vsyncpa [#allocation4], 0
    // Predicated region
    $region2: #{tpu_custom_call.1} parent=1 // pred_check
      _
    $region3: #{tpu_custom_call.1} parent=1 // pred_check_branch
      %10 = sbr.rel (0) target = $region5
    $region4: #{tpu_custom_call.1} parent=1 // pred_region
      _
    $region5: #{tpu_custom_call.1} parent=1 // pred_fallthru
      _
    // Predicated region
    $region6: #{tpu_custom_call.1} parent=1 // pred_check
      _
    $region7: #{tpu_custom_call.1} parent=1 // pred_check_branch
      %12 = sbr.rel (0) target = $region9
    $region8: #{tpu_custom_call.1} parent=1 // pred_region
      _
    $region9: #{tpu_custom_call.1} parent=1 // pred_fallthru
      _
    // Predicated region
    $region10: #{tpu_custom_call.1} parent=1 // pred_check
      _
    $region11: #{tpu_custom_call.1} parent=1 // pred_check_branch
      %14 = sbr.rel (0) target = $region13
    $region12: #{tpu_custom_call.1} parent=1 // pred_region
      _
    $region13: #{tpu_custom_call.1} parent=1 // pred_fallthru
      _
    %p15 = scmp.eq.s32.totalorder 0, 0
    // Predicated region
    $region14: #{tpu_custom_call.1} parent=1 // pred_check
      %p16 = pneg %p15
    $region15: #{tpu_custom_call.1} parent=1 // pred_check_branch
      %18 = sbr.rel (%p16) target = $region17
    $region16: #{tpu_custom_call.1} parent=1 // pred_region
      %19 = vst [vmem:[#allocation2] sm:$0xff] 0.0
    $region17: #{tpu_custom_call.1} parent=1 // pred_fallthru
      _
    %v20 = vld [vmem:[%s0] sm:$0xff]
    %v21 = vld [vmem:[%s1] sm:$0xff]
    %v22 = vld [vmem:[%s1 + $0x8] sm:$0xff]
    %v23 = vld [vmem:[%s1 + $0x10] sm:$0xff]
    %v24 = vld [vmem:[%s1 + $0x18] sm:$0xff]
    %v25 = vld [vmem:[%s1 + $0x20] sm:$0xff]
    %v26 = vld [vmem:[%s1 + $0x28] sm:$0xff]
    %v27 = vld [vmem:[%s1 + $0x30] sm:$0xff]
    %v28 = vld [vmem:[%s1 + $0x38] sm:$0xff]
    %v29 = vld [vmem:[%s1 + $0x40] sm:$0xff]
    %v30 = vld [vmem:[%s1 + $0x48] sm:$0xff]
    %v31 = vld [vmem:[%s1 + $0x50] sm:$0xff]
    %v32 = vld [vmem:[%s1 + $0x58] sm:$0xff]
    %v33 = vld [vmem:[%s1 + $0x60] sm:$0xff]
    %v34 = vld [vmem:[%s1 + $0x68] sm:$0xff]
    %v35 = vld [vmem:[%s1 + $0x70] sm:$0xff]
    %v36 = vld [vmem:[%s1 + $0x78] sm:$0xff]
    %vm37 = vcmask 261120
    %v39 = vsel %vm37, %v20, 0
    %v42 = vsel %vm37, %v21, 0
    %v45 = vsel %vm37, %v22, 0
    %v48 = vsel %vm37, %v23, 0
    %v51 = vsel %vm37, %v24, 0
    %v54 = vsel %vm37, %v25, 0
    %v57 = vsel %vm37, %v26, 0
    %v60 = vsel %vm37, %v27, 0
    %v63 = vsel %vm37, %v28, 0
    %v66 = vsel %vm37, %v29, 0
    %v69 = vsel %vm37, %v30, 0
    %v72 = vsel %vm37, %v31, 0
    %v75 = vsel %vm37, %v32, 0
    %v78 = vsel %vm37, %v33, 0
    %v81 = vsel %vm37, %v34, 0
    %v84 = vsel %vm37, %v35, 0
    %v87 = vsel %vm37, %v36, 0
    %89 = vmatpush.xpose.msra.mxu0 %v87
    %90 = vmatpush.xpose.msra.mxu0 %v84
    %91 = vmatpush.xpose.msra.mxu0 %v81
    %92 = vmatpush.xpose.msra.mxu0 %v78
    %93 = vmatpush.xpose.msra.mxu0 %v75
    %94 = vmatpush.xpose.msra.mxu0 %v72
    %95 = vmatpush.xpose.msra.mxu0 %v69
    %96 = vmatpush.xpose.msra.mxu0 %v66
    %97 = vmatpush.xpose.msra.mxu0 %v63
    %98 = vmatpush.xpose.msra.mxu0 %v60
    %99 = vmatpush.xpose.msra.mxu0 %v57
    %100 = vmatpush.xpose.msra.mxu0 %v54
    %101 = vmatpush.xpose.msra.mxu0 %v51
    %102 = vmatpush.xpose.msra.mxu0 %v48
    %103 = vmatpush.xpose.msra.mxu0 %v45
    %104 = vmatpush.xpose.msra.mxu0 %v42
    %105 = vmatmul.f32.gmra.mxu0 %v39
    %v106 = vpop.f32.mrf.mxu0
    %v107 = vadd.f32 0.0, %v106
    %108 = vdwg.mxu0
    %v109 = vmax.f32 %v107, 0.0
    %v110 = vld [vmem:[%s2] sm:$0xff]
    %v111 = vld [vmem:[%s2 + $0x8] sm:$0xff]
    %v112 = vld [vmem:[%s2 + $0x10] sm:$0xff]
    %v113 = vld [vmem:[%s2 + $0x18] sm:$0xff]
    %v114 = vld [vmem:[%s2 + $0x20] sm:$0xff]
    %v115 = vld [vmem:[%s2 + $0x28] sm:$0xff]
    %v116 = vld [vmem:[%s2 + $0x30] sm:$0xff]
    %v117 = vld [vmem:[%s2 + $0x38] sm:$0xff]
    %v118 = vld [vmem:[%s2 + $0x40] sm:$0xff]
    %v119 = vld [vmem:[%s2 + $0x48] sm:$0xff]
    %v120 = vld [vmem:[%s2 + $0x50] sm:$0xff]
    %v121 = vld [vmem:[%s2 + $0x58] sm:$0xff]
    %v122 = vld [vmem:[%s2 + $0x60] sm:$0xff]
    %v123 = vld [vmem:[%s2 + $0x68] sm:$0xff]
    %v124 = vld [vmem:[%s2 + $0x70] sm:$0xff]
    %v125 = vld [vmem:[%s2 + $0x78] sm:$0xff]
    %v126 = vld [vmem:[#allocation2] sm:$0xff]
    %127 = vmatpush.xpose.msra.mxu0 %v125
    %128 = vmatpush.xpose.msra.mxu0 %v124
    %129 = vmatpush.xpose.msra.mxu0 %v123
    %130 = vmatpush.xpose.msra.mxu0 %v122
    %131 = vmatpush.xpose.msra.mxu0 %v121
    %132 = vmatpush.xpose.msra.mxu0 %v120
    %133 = vmatpush.xpose.msra.mxu0 %v119
    %134 = vmatpush.xpose.msra.mxu0 %v118
    %135 = vmatpush.xpose.msra.mxu0 %v117
    %136 = vmatpush.xpose.msra.mxu0 %v116
    %137 = vmatpush.xpose.msra.mxu0 %v115
    %138 = vmatpush.xpose.msra.mxu0 %v114
    %139 = vmatpush.xpose.msra.mxu0 %v113
    %140 = vmatpush.xpose.msra.mxu0 %v112
    %141 = vmatpush.xpose.msra.mxu0 %v111
    %142 = vmatpush.xpose.msra.mxu0 %v110
    %143 = vmatmul.f32.gmra.mxu0 %v109
    %v144 = vpop.f32.mrf.mxu0
    %v145 = vadd.f32 0.0, %v144
    %146 = vdwg.mxu0
    %v147 = vadd.f32 %v126, %v145
    %148 = vst [vmem:[#allocation2] sm:$0xff] %v147
    // Predicated region
    $region18: #{tpu_custom_call.1} parent=1 // pred_check
      %p149 = pneg %p15
    $region19: #{tpu_custom_call.1} parent=1 // pred_check_branch
      %151 = sbr.rel (%p149) target = $region21
    $region20: #{tpu_custom_call.1} parent=1 // pred_region
      %v152 = vld [vmem:[#allocation2] sm:$0xff]
      %153 = vst [vmem:[#allocation3] sm:$0xff] %v152
    $region21: #{tpu_custom_call.1} parent=1 // pred_fallthru
      _
    // Predicated region
    $region22: #{tpu_custom_call.1} parent=1 // pred_check
      _
    $region23: #{tpu_custom_call.1} parent=1 // pred_check_branch
      %155 = sbr.rel (0) target = $region25
    $region24: #{tpu_custom_call.1} parent=1 // pred_region
      %157 = vsyncadd [#allocation4], 0
      %s159 = sshll.u32 [#allocation3], 4
      %s160 = int_to_ptr.vmem [resolvable:$true] %s159
      %s161 = sshll.u32 %s3, 4
      %s162 = int_to_ptr.hbm [resolvable:$true] %s161
      %164 = dma.vmem_to_hbm [thread:$0]  %s160, 128, %s162, [#allocation4]
    $region25: #{tpu_custom_call.1} parent=1 // pred_fallthru
      _
    // Predicated region
    $region26: #{tpu_custom_call.1} parent=1 // pred_check
      _
    $region27: #{tpu_custom_call.1} parent=1 // pred_check_branch
      %166 = sbr.rel (0) target = $region29
    $region28: #{tpu_custom_call.1} parent=1 // pred_region
      %168 = dma.done [#allocation4], 128
    $region29: #{tpu_custom_call.1} parent=1 // pred_fallthru
      _
    %169 = vsyncpa [#allocation4], 1

</llo_original>
